<compile_context>
chip_gen: v6e
topology: v6e:2x2x1
jax: 0.10.0
libtpu: 0.0.40
codegen_flags: <defaults>
</compile_context>

<pallas_src>
import functools

import jax
import jax.numpy as jnp
from jax.experimental import pallas as pl
from jax.experimental.pallas import tpu as pltpu


def _downsample_kernel(x_ref, mcol_ref, w_ref, o_ref, *, W):
    """2x2 average pool + 1x1 conv for one (batch, output-row-block) tile.

    x_ref:    (1, C, TH, 2*W)   VMEM  -- rows 2p and 2p+1 concatenated on lanes
    mcol_ref: (W, Wo)           VMEM  -- resident column-pool matrix (0.25 baked in)
    w_ref:    (Cout, C)         SMEM  -- 1x1 conv weight, read as scalars
    o_ref:    (1, Cout, TH, Wo) VMEM
    """
    C = x_ref.shape[1]
    Cout = o_ref.shape[1]

    # Upcast once after load: bf16 I/O keeps HBM traffic low, f32 math keeps
    # v5e (no bf16 VPU) fast and accumulation exact.
    x = x_ref[0].astype(jnp.float32)                       # (C, TH, 2W)

    # Vertical pool: the two rows of each pair are the two contiguous W-wide
    # lane halves -> plain slice + add on the VPU (no strided selects).
    rowsum = x[:, :, :W] + x[:, :, W:]                     # (C, TH, W)

    # Horizontal pool = lane compaction via a tiny (W, Wo) MXU matmul per
    # channel (clean 2-D dots; 0.25 of the 2x2 average is baked into mcol).
    pooled = [
        jnp.dot(rowsum[c], mcol_ref[...], preferred_element_type=jnp.float32)
        for c in range(C)
    ]                                                      # C x (TH, Wo) f32

    # 1x1 conv (C -> Cout) as SMEM-scalar x vector FMAs on the VPU; with the
    # module's tiny channel counts this beats an M=Cout, K=C MXU matmul.
    # TODO(synk): for large channel counts switch this unrolled loop to an MXU
    # channel-mix matmul to bound code size.
    for o in range(Cout):
        acc = w_ref[o, 0] * pooled[0]
        for c in range(1, C):
            acc = acc + w_ref[o, c] * pooled[c]
        o_ref[0, o, :, :] = acc.astype(o_ref.dtype)


def _pick_tile_rows(Ho, C, Cout, W, Wo, x_itemsize, o_itemsize):
    """Largest output-row tile TH (multiple of 8, dividing Ho) whose per-step
    working set fits a conservative budget, preferring >=4 row steps so the
    pipeline can double-buffer.  Returns (TH, estimated block bytes)."""

    def block_bytes(th):
        xin = C * th * 2 * W * x_itemsize * 2              # double-buffered input
        out = Cout * th * Wo * o_itemsize * 2              # double-buffered output
        tmp = (C * th * (2 * W + W + Wo) + Cout * th * Wo) * 4   # f32 temporaries
        res = W * Wo * 4 + 4096                            # resident mcol + SMEM weight
        return xin + out + tmp + res

    cands = [t for t in range(8, Ho + 1, 8) if Ho % t == 0]
    if not cands:                                          # tiny Ho: one row block
        return Ho, block_bytes(Ho)
    budget = 12 * 2**20                                    # leaves headroom inside v7x's 64 MiB
    fitting = [t for t in cands if block_bytes(t) <= budget] or [min(cands)]
    pipelined = [t for t in fitting if Ho // t >= 4]
    th = max(pipelined) if pipelined else max(fitting)
    return th, block_bytes(th)


def downsample(x_nchw, conv_w_oihw):
    """x_nchw: (N, C, H, W). conv_w_oihw: (Cout, C, 1, 1). Returns (N, Cout, H//2, W//2).

    Output dtype follows the input dtype (use bf16 inputs for bf16 I/O; the
    kernel accumulates in f32 either way)."""
    N, C, H, W = x_nchw.shape
    Cout = conv_w_oihw.shape[0]
    if H % 2 or W % 2:
        # TODO(synk): bilinear(scale=0.5, align_corners=False) == 2x2 avg-pool only
        # holds for even H/W; odd sizes need true bilinear boundary handling.
        raise NotImplementedError("DownSample kernel requires even H and W")
    Ho, Wo = H // 2, W // 2
    out_dtype = x_nchw.dtype

    # Free trailing-dim reshape (no transpose): (H, W) -> (Ho, 2W) puts each row
    # pair (2p, 2p+1) side by side on the lane axis.
    x_rows = x_nchw.reshape(N, C, Ho, 2 * W)
    # 1x1 conv weight as f32 scalars for SMEM.
    w_mat = conv_w_oihw.reshape(Cout, C).astype(jnp.float32)
    # Separable column-pool matrix, built once in the wrapper and kept resident
    # in VMEM (constant index_map) instead of being rebuilt every grid step.
    mcol = 0.25 * (
        (jnp.arange(W)[:, None] // 2) == jnp.arange(Wo)[None, :]
    ).astype(jnp.float32)                                   # (W, Wo)

    TH, blk_bytes = _pick_tile_rows(
        Ho, C, Cout, W, Wo, x_rows.dtype.itemsize, jnp.dtype(out_dtype).itemsize)
    vmem_limit = int(min(max(4 * blk_bytes, 8 * 2**20), 48 * 2**20))

    kernel = functools.partial(_downsample_kernel, W=W)

    out = pl.pallas_call(
        kernel,
        out_shape=jax.ShapeDtypeStruct((N, Cout, Ho, Wo), out_dtype),
        grid_spec=pltpu.PrefetchScalarGridSpec(
            num_scalar_prefetch=0,
            grid=(N, Ho // TH),                             # batch x output-row blocks
            in_specs=[
                pl.BlockSpec((1, C, TH, 2 * W), lambda n, r: (n, 0, r, 0)),
                pl.BlockSpec((W, Wo), lambda n, r: (0, 0)),          # resident
                pl.BlockSpec(memory_space=pltpu.MemorySpace.SMEM),   # weight scalars
            ],
            out_specs=pl.BlockSpec((1, Cout, TH, Wo), lambda n, r: (n, 0, r, 0)),
        ),
        compiler_params=pltpu.CompilerParams(
            dimension_semantics=("parallel", "parallel"),
            vmem_limit_bytes=vmem_limit,
        ),
    )(x_rows, mcol, w_mat)

    return out


def _reference(x_nchw, conv_w_oihw):
    N, C, H, W = x_nchw.shape
    pooled = x_nchw.reshape(N, C, H // 2, 2, W // 2, 2).mean(axis=(3, 5))
    w = conv_w_oihw.reshape(conv_w_oihw.shape[0], C)
    return jnp.einsum('oc,nchw->nohw', w, pooled)


if __name__ == "__main__":
    # Module config: in_channels=4, s_factor=4 -> out_channels=8
    in_channels, s_factor = 4, 4
    out_channels = in_channels + s_factor
    N, H, W = 2, 16, 16

    key = jax.random.PRNGKey(0)
    kx, kw = jax.random.split(key)
    x = jax.random.normal(kx, (N, in_channels, H, W), dtype=jnp.float32)
    # Deterministic synthetic 1x1 conv weight, PyTorch OIHW layout, bias=False.
    conv_w = 0.1 * jax.random.normal(kw, (out_channels, in_channels, 1, 1),
                                     dtype=jnp.float32)

    y_ref = _reference(x, conv_w)

    # f32 I/O: exact module semantics.
    y = jax.block_until_ready(downsample(x, conv_w))
    assert y.shape == (N, out_channels, H // 2, W // 2)
    assert jnp.allclose(y, y_ref, atol=1e-5, rtol=1e-5)

    # bf16 I/O: halves HBM traffic (the op is bandwidth-bound); f32 accumulation
    # happens in-kernel, so only I/O rounding differs.
    y_bf16 = jax.block_until_ready(downsample(x.astype(jnp.bfloat16), conv_w))
    assert y_bf16.dtype == jnp.bfloat16
    assert jnp.allclose(y_bf16.astype(jnp.float32), y_ref, atol=2e-2, rtol=2e-2)

    print("KERNEL_OK")
</pallas_src>

<mosaic_0001>
module attributes {stable_mosaic.version = 11 : i64} {
  func.func @_downsample_kernel(%arg0: i32, %arg1: i32, %arg2: memref<1x4x8x32xf32, #tpu.memory_space<vmem>>, %arg3: memref<16x8xf32, #tpu.memory_space<vmem>>, %arg4: memref<8x4xf32, #tpu.memory_space<smem>>, %arg5: memref<1x8x8x8xf32, #tpu.memory_space<vmem>>) attributes {dimension_semantics = [#tpu.dimension_semantics<parallel>, #tpu.dimension_semantics<parallel>], iteration_bounds = array<i64: 2, 1>, scalar_prefetch = 0 : i64, scratch_operands = 0 : i64, tpu.core_type = #tpu.core_type<tc>, window_params = [{transform_indices = @transform_0, window_bounds = array<i64: 1, 4, 8, 32>}, {pipeline_mode = #tpu.pipeline_mode<synchronous>, transform_indices = @transform_1, window_bounds = array<i64: 16, 8>}, {transform_indices = @transform_2, window_bounds = array<i64: 8, 4>}, {transform_indices = @transform_3, window_bounds = array<i64: 1, 8, 8, 8>}]} {
    %c0 = arith.constant 0 : index
    %c0_0 = arith.constant 0 : index
    %c0_1 = arith.constant 0 : index
    %c0_2 = arith.constant 0 : index
    %0 = vector.load %arg2[%c0, %c0_0, %c0_1, %c0_2] : memref<1x4x8x32xf32, #tpu.memory_space<vmem>>, vector<1x4x8x32xf32>
    %1 = vector.shape_cast %0 : vector<1x4x8x32xf32> to vector<4x8x32xf32>
    %2 = vector.extract_strided_slice %1 {offsets = [0, 0, 0], sizes = [4, 8, 16], strides = [1, 1, 1]} : vector<4x8x32xf32> to vector<4x8x16xf32>
    %3 = vector.extract_strided_slice %1 {offsets = [0, 0, 16], sizes = [4, 8, 16], strides = [1, 1, 1]} : vector<4x8x32xf32> to vector<4x8x16xf32>
    %4 = arith.addf %2, %3 : vector<4x8x16xf32>
    %5 = vector.extract_strided_slice %4 {offsets = [0, 0, 0], sizes = [1, 8, 16], strides = [1, 1, 1]} : vector<4x8x16xf32> to vector<1x8x16xf32>
    %6 = vector.shape_cast %5 : vector<1x8x16xf32> to vector<8x16xf32>
    %c0_3 = arith.constant 0 : index
    %c0_4 = arith.constant 0 : index
    %7 = vector.load %arg3[%c0_3, %c0_4] : memref<16x8xf32, #tpu.memory_space<vmem>>, vector<16x8xf32>
    %cst = arith.constant dense<0.000000e+00> : vector<8x8xf32>
    %8 = tpu.matmul %6, %7, %cst {dimension_numbers = #tpu.dot_dimension_numbers<[1], [0], [0], [1], [0, 0, 1, 1], [], []>} : vector<8x16xf32>, vector<16x8xf32>, vector<8x8xf32> -> vector<8x8xf32>
    %9 = vector.extract_strided_slice %4 {offsets = [1, 0, 0], sizes = [1, 8, 16], strides = [1, 1, 1]} : vector<4x8x16xf32> to vector<1x8x16xf32>
    %10 = vector.shape_cast %9 : vector<1x8x16xf32> to vector<8x16xf32>
    %c0_5 = arith.constant 0 : index
    %c0_6 = arith.constant 0 : index
    %11 = vector.load %arg3[%c0_5, %c0_6] : memref<16x8xf32, #tpu.memory_space<vmem>>, vector<16x8xf32>
    %cst_7 = arith.constant dense<0.000000e+00> : vector<8x8xf32>
    %12 = tpu.matmul %10, %11, %cst_7 {dimension_numbers = #tpu.dot_dimension_numbers<[1], [0], [0], [1], [0, 0, 1, 1], [], []>} : vector<8x16xf32>, vector<16x8xf32>, vector<8x8xf32> -> vector<8x8xf32>
    %13 = vector.extract_strided_slice %4 {offsets = [2, 0, 0], sizes = [1, 8, 16], strides = [1, 1, 1]} : vector<4x8x16xf32> to vector<1x8x16xf32>
    %14 = vector.shape_cast %13 : vector<1x8x16xf32> to vector<8x16xf32>
    %c0_8 = arith.constant 0 : index
    %c0_9 = arith.constant 0 : index
    %15 = vector.load %arg3[%c0_8, %c0_9] : memref<16x8xf32, #tpu.memory_space<vmem>>, vector<16x8xf32>
    %cst_10 = arith.constant dense<0.000000e+00> : vector<8x8xf32>
    %16 = tpu.matmul %14, %15, %cst_10 {dimension_numbers = #tpu.dot_dimension_numbers<[1], [0], [0], [1], [0, 0, 1, 1], [], []>} : vector<8x16xf32>, vector<16x8xf32>, vector<8x8xf32> -> vector<8x8xf32>
    %17 = vector.extract_strided_slice %4 {offsets = [3, 0, 0], sizes = [1, 8, 16], strides = [1, 1, 1]} : vector<4x8x16xf32> to vector<1x8x16xf32>
    %18 = vector.shape_cast %17 : vector<1x8x16xf32> to vector<8x16xf32>
    %c0_11 = arith.constant 0 : index
    %c0_12 = arith.constant 0 : index
    %19 = vector.load %arg3[%c0_11, %c0_12] : memref<16x8xf32, #tpu.memory_space<vmem>>, vector<16x8xf32>
    %cst_13 = arith.constant dense<0.000000e+00> : vector<8x8xf32>
    %20 = tpu.matmul %18, %19, %cst_13 {dimension_numbers = #tpu.dot_dimension_numbers<[1], [0], [0], [1], [0, 0, 1, 1], [], []>} : vector<8x16xf32>, vector<16x8xf32>, vector<8x8xf32> -> vector<8x8xf32>
    %c0_14 = arith.constant 0 : index
    %c0_15 = arith.constant 0 : index
    %21 = memref.load %arg4[%c0_14, %c0_15] : memref<8x4xf32, #tpu.memory_space<smem>>
    %22 = vector.broadcast %21 : f32 to vector<8x8xf32>
    %23 = arith.mulf %22, %8 : vector<8x8xf32>
    %c0_16 = arith.constant 0 : index
    %c1 = arith.constant 1 : index
    %24 = memref.load %arg4[%c0_16, %c1] : memref<8x4xf32, #tpu.memory_space<smem>>
    %25 = vector.broadcast %24 : f32 to vector<8x8xf32>
    %26 = arith.mulf %25, %12 : vector<8x8xf32>
    %27 = arith.addf %23, %26 : vector<8x8xf32>
    %c0_17 = arith.constant 0 : index
    %c2 = arith.constant 2 : index
    %28 = memref.load %arg4[%c0_17, %c2] : memref<8x4xf32, #tpu.memory_space<smem>>
    %29 = vector.broadcast %28 : f32 to vector<8x8xf32>
    %30 = arith.mulf %29, %16 : vector<8x8xf32>
    %31 = arith.addf %27, %30 : vector<8x8xf32>
    %c0_18 = arith.constant 0 : index
    %c3 = arith.constant 3 : index
    %32 = memref.load %arg4[%c0_18, %c3] : memref<8x4xf32, #tpu.memory_space<smem>>
    %33 = vector.broadcast %32 : f32 to vector<8x8xf32>
    %34 = arith.mulf %33, %20 : vector<8x8xf32>
    %35 = arith.addf %31, %34 : vector<8x8xf32>
    %c0_19 = arith.constant 0 : index
    %c0_20 = arith.constant 0 : index
    %c0_21 = arith.constant 0 : index
    %c0_22 = arith.constant 0 : index
    %36 = vector.load %arg5[%c0_19, %c0_20, %c0_21, %c0_22] : memref<1x8x8x8xf32, #tpu.memory_space<vmem>>, vector<1x1x8x8xf32>
    %37 = vector.shape_cast %36 : vector<1x1x8x8xf32> to vector<8x8xf32>
    %38 = vector.shape_cast %35 : vector<8x8xf32> to vector<1x1x8x8xf32>
    tpu.vector_store %arg5[%c0_19, %c0_20, %c0_21, %c0_22], %38 {strides = array<i32>} : memref<1x8x8x8xf32, #tpu.memory_space<vmem>>, vector<1x1x8x8xf32>,
    %c1_23 = arith.constant 1 : index
    %c0_24 = arith.constant 0 : index
    %39 = memref.load %arg4[%c1_23, %c0_24] : memref<8x4xf32, #tpu.memory_space<smem>>
    %40 = vector.broadcast %39 : f32 to vector<8x8xf32>
    %41 = arith.mulf %40, %8 : vector<8x8xf32>
    %c1_25 = arith.constant 1 : index
    %c1_26 = arith.constant 1 : index
    %42 = memref.load %arg4[%c1_25, %c1_26] : memref<8x4xf32, #tpu.memory_space<smem>>
    %43 = vector.broadcast %42 : f32 to vector<8x8xf32>
    %44 = arith.mulf %43, %12 : vector<8x8xf32>
    %45 = arith.addf %41, %44 : vector<8x8xf32>
    %c1_27 = arith.constant 1 : index
    %c2_28 = arith.constant 2 : index
    %46 = memref.load %arg4[%c1_27, %c2_28] : memref<8x4xf32, #tpu.memory_space<smem>>
    %47 = vector.broadcast %46 : f32 to vector<8x8xf32>
    %48 = arith.mulf %47, %16 : vector<8x8xf32>
    %49 = arith.addf %45, %48 : vector<8x8xf32>
    %c1_29 = arith.constant 1 : index
    %c3_30 = arith.constant 3 : index
    %50 = memref.load %arg4[%c1_29, %c3_30] : memref<8x4xf32, #tpu.memory_space<smem>>
    %51 = vector.broadcast %50 : f32 to vector<8x8xf32>
    %52 = arith.mulf %51, %20 : vector<8x8xf32>
    %53 = arith.addf %49, %52 : vector<8x8xf32>
    %c0_31 = arith.constant 0 : index
    %c1_32 = arith.constant 1 : index
    %c0_33 = arith.constant 0 : index
    %c0_34 = arith.constant 0 : index
    %54 = vector.load %arg5[%c0_31, %c1_32, %c0_33, %c0_34] : memref<1x8x8x8xf32, #tpu.memory_space<vmem>>, vector<1x1x8x8xf32>
    %55 = vector.shape_cast %54 : vector<1x1x8x8xf32> to vector<8x8xf32>
    %56 = vector.shape_cast %53 : vector<8x8xf32> to vector<1x1x8x8xf32>
    tpu.vector_store %arg5[%c0_31, %c1_32, %c0_33, %c0_34], %56 {strides = array<i32>} : memref<1x8x8x8xf32, #tpu.memory_space<vmem>>, vector<1x1x8x8xf32>,
    %c2_35 = arith.constant 2 : index
    %c0_36 = arith.constant 0 : index
    %57 = memref.load %arg4[%c2_35, %c0_36] : memref<8x4xf32, #tpu.memory_space<smem>>
    %58 = vector.broadcast %57 : f32 to vector<8x8xf32>
    %59 = arith.mulf %58, %8 : vector<8x8xf32>
    %c2_37 = arith.constant 2 : index
    %c1_38 = arith.constant 1 : index
    %60 = memref.load %arg4[%c2_37, %c1_38] : memref<8x4xf32, #tpu.memory_space<smem>>
    %61 = vector.broadcast %60 : f32 to vector<8x8xf32>
    %62 = arith.mulf %61, %12 : vector<8x8xf32>
    %63 = arith.addf %59, %62 : vector<8x8xf32>
    %c2_39 = arith.constant 2 : index
    %c2_40 = arith.constant 2 : index
    %64 = memref.load %arg4[%c2_39, %c2_40] : memref<8x4xf32, #tpu.memory_space<smem>>
    %65 = vector.broadcast %64 : f32 to vector<8x8xf32>
    %66 = arith.mulf %65, %16 : vector<8x8xf32>
    %67 = arith.addf %63, %66 : vector<8x8xf32>
    %c2_41 = arith.constant 2 : index
    %c3_42 = arith.constant 3 : index
    %68 = memref.load %arg4[%c2_41, %c3_42] : memref<8x4xf32, #tpu.memory_space<smem>>
    %69 = vector.broadcast %68 : f32 to vector<8x8xf32>
    %70 = arith.mulf %69, %20 : vector<8x8xf32>
    %71 = arith.addf %67, %70 : vector<8x8xf32>
    %c0_43 = arith.constant 0 : index
    %c2_44 = arith.constant 2 : index
    %c0_45 = arith.constant 0 : index
    %c0_46 = arith.constant 0 : index
    %72 = vector.load %arg5[%c0_43, %c2_44, %c0_45, %c0_46] : memref<1x8x8x8xf32, #tpu.memory_space<vmem>>, vector<1x1x8x8xf32>
    %73 = vector.shape_cast %72 : vector<1x1x8x8xf32> to vector<8x8xf32>
    %74 = vector.shape_cast %71 : vector<8x8xf32> to vector<1x1x8x8xf32>
    tpu.vector_store %arg5[%c0_43, %c2_44, %c0_45, %c0_46], %74 {strides = array<i32>} : memref<1x8x8x8xf32, #tpu.memory_space<vmem>>, vector<1x1x8x8xf32>,
    %c3_47 = arith.constant 3 : index
    %c0_48 = arith.constant 0 : index
    %75 = memref.load %arg4[%c3_47, %c0_48] : memref<8x4xf32, #tpu.memory_space<smem>>
    %76 = vector.broadcast %75 : f32 to vector<8x8xf32>
    %77 = arith.mulf %76, %8 : vector<8x8xf32>
    %c3_49 = arith.constant 3 : index
    %c1_50 = arith.constant 1 : index
    %78 = memref.load %arg4[%c3_49, %c1_50] : memref<8x4xf32, #tpu.memory_space<smem>>
    %79 = vector.broadcast %78 : f32 to vector<8x8xf32>
    %80 = arith.mulf %79, %12 : vector<8x8xf32>
    %81 = arith.addf %77, %80 : vector<8x8xf32>
    %c3_51 = arith.constant 3 : index
    %c2_52 = arith.constant 2 : index
    %82 = memref.load %arg4[%c3_51, %c2_52] : memref<8x4xf32, #tpu.memory_space<smem>>
    %83 = vector.broadcast %82 : f32 to vector<8x8xf32>
    %84 = arith.mulf %83, %16 : vector<8x8xf32>
    %85 = arith.addf %81, %84 : vector<8x8xf32>
    %c3_53 = arith.constant 3 : index
    %c3_54 = arith.constant 3 : index
    %86 = memref.load %arg4[%c3_53, %c3_54] : memref<8x4xf32, #tpu.memory_space<smem>>
    %87 = vector.broadcast %86 : f32 to vector<8x8xf32>
    %88 = arith.mulf %87, %20 : vector<8x8xf32>
    %89 = arith.addf %85, %88 : vector<8x8xf32>
    %c0_55 = arith.constant 0 : index
    %c3_56 = arith.constant 3 : index
    %c0_57 = arith.constant 0 : index
    %c0_58 = arith.constant 0 : index
    %90 = vector.load %arg5[%c0_55, %c3_56, %c0_57, %c0_58] : memref<1x8x8x8xf32, #tpu.memory_space<vmem>>, vector<1x1x8x8xf32>
    %91 = vector.shape_cast %90 : vector<1x1x8x8xf32> to vector<8x8xf32>
    %92 = vector.shape_cast %89 : vector<8x8xf32> to vector<1x1x8x8xf32>
    tpu.vector_store %arg5[%c0_55, %c3_56, %c0_57, %c0_58], %92 {strides = array<i32>} : memref<1x8x8x8xf32, #tpu.memory_space<vmem>>, vector<1x1x8x8xf32>,
    %c4 = arith.constant 4 : index
    %c0_59 = arith.constant 0 : index
    %93 = memref.load %arg4[%c4, %c0_59] : memref<8x4xf32, #tpu.memory_space<smem>>
    %94 = vector.broadcast %93 : f32 to vector<8x8xf32>
    %95 = arith.mulf %94, %8 : vector<8x8xf32>
    %c4_60 = arith.constant 4 : index
    %c1_61 = arith.constant 1 : index
    %96 = memref.load %arg4[%c4_60, %c1_61] : memref<8x4xf32, #tpu.memory_space<smem>>
    %97 = vector.broadcast %96 : f32 to vector<8x8xf32>
    %98 = arith.mulf %97, %12 : vector<8x8xf32>
    %99 = arith.addf %95, %98 : vector<8x8xf32>
    %c4_62 = arith.constant 4 : index
    %c2_63 = arith.constant 2 : index
    %100 = memref.load %arg4[%c4_62, %c2_63] : memref<8x4xf32, #tpu.memory_space<smem>>
    %101 = vector.broadcast %100 : f32 to vector<8x8xf32>
    %102 = arith.mulf %101, %16 : vector<8x8xf32>
    %103 = arith.addf %99, %102 : vector<8x8xf32>
    %c4_64 = arith.constant 4 : index
    %c3_65 = arith.constant 3 : index
    %104 = memref.load %arg4[%c4_64, %c3_65] : memref<8x4xf32, #tpu.memory_space<smem>>
    %105 = vector.broadcast %104 : f32 to vector<8x8xf32>
    %106 = arith.mulf %105, %20 : vector<8x8xf32>
    %107 = arith.addf %103, %106 : vector<8x8xf32>
    %c0_66 = arith.constant 0 : index
    %c4_67 = arith.constant 4 : index
    %c0_68 = arith.constant 0 : index
    %c0_69 = arith.constant 0 : index
    %108 = vector.load %arg5[%c0_66, %c4_67, %c0_68, %c0_69] : memref<1x8x8x8xf32, #tpu.memory_space<vmem>>, vector<1x1x8x8xf32>
    %109 = vector.shape_cast %108 : vector<1x1x8x8xf32> to vector<8x8xf32>
    %110 = vector.shape_cast %107 : vector<8x8xf32> to vector<1x1x8x8xf32>
    tpu.vector_store %arg5[%c0_66, %c4_67, %c0_68, %c0_69], %110 {strides = array<i32>} : memref<1x8x8x8xf32, #tpu.memory_space<vmem>>, vector<1x1x8x8xf32>,
    %c5 = arith.constant 5 : index
    %c0_70 = arith.constant 0 : index
    %111 = memref.load %arg4[%c5, %c0_70] : memref<8x4xf32, #tpu.memory_space<smem>>
    %112 = vector.broadcast %111 : f32 to vector<8x8xf32>
    %113 = arith.mulf %112, %8 : vector<8x8xf32>
    %c5_71 = arith.constant 5 : index
    %c1_72 = arith.constant 1 : index
    %114 = memref.load %arg4[%c5_71, %c1_72] : memref<8x4xf32, #tpu.memory_space<smem>>
    %115 = vector.broadcast %114 : f32 to vector<8x8xf32>
    %116 = arith.mulf %115, %12 : vector<8x8xf32>
    %117 = arith.addf %113, %116 : vector<8x8xf32>
    %c5_73 = arith.constant 5 : index
    %c2_74 = arith.constant 2 : index
    %118 = memref.load %arg4[%c5_73, %c2_74] : memref<8x4xf32, #tpu.memory_space<smem>>
    %119 = vector.broadcast %118 : f32 to vector<8x8xf32>
    %120 = arith.mulf %119, %16 : vector<8x8xf32>
    %121 = arith.addf %117, %120 : vector<8x8xf32>
    %c5_75 = arith.constant 5 : index
    %c3_76 = arith.constant 3 : index
    %122 = memref.load %arg4[%c5_75, %c3_76] : memref<8x4xf32, #tpu.memory_space<smem>>
    %123 = vector.broadcast %122 : f32 to vector<8x8xf32>
    %124 = arith.mulf %123, %20 : vector<8x8xf32>
    %125 = arith.addf %121, %124 : vector<8x8xf32>
    %c0_77 = arith.constant 0 : index
    %c5_78 = arith.constant 5 : index
    %c0_79 = arith.constant 0 : index
    %c0_80 = arith.constant 0 : index
    %126 = vector.load %arg5[%c0_77, %c5_78, %c0_79, %c0_80] : memref<1x8x8x8xf32, #tpu.memory_space<vmem>>, vector<1x1x8x8xf32>
    %127 = vector.shape_cast %126 : vector<1x1x8x8xf32> to vector<8x8xf32>
    %128 = vector.shape_cast %125 : vector<8x8xf32> to vector<1x1x8x8xf32>
    tpu.vector_store %arg5[%c0_77, %c5_78, %c0_79, %c0_80], %128 {strides = array<i32>} : memref<1x8x8x8xf32, #tpu.memory_space<vmem>>, vector<1x1x8x8xf32>,
    %c6 = arith.constant 6 : index
    %c0_81 = arith.constant 0 : index
    %129 = memref.load %arg4[%c6, %c0_81] : memref<8x4xf32, #tpu.memory_space<smem>>
    %130 = vector.broadcast %129 : f32 to vector<8x8xf32>
    %131 = arith.mulf %130, %8 : vector<8x8xf32>
    %c6_82 = arith.constant 6 : index
    %c1_83 = arith.constant 1 : index
    %132 = memref.load %arg4[%c6_82, %c1_83] : memref<8x4xf32, #tpu.memory_space<smem>>
    %133 = vector.broadcast %132 : f32 to vector<8x8xf32>
    %134 = arith.mulf %133, %12 : vector<8x8xf32>
    %135 = arith.addf %131, %134 : vector<8x8xf32>
    %c6_84 = arith.constant 6 : index
    %c2_85 = arith.constant 2 : index
    %136 = memref.load %arg4[%c6_84, %c2_85] : memref<8x4xf32, #tpu.memory_space<smem>>
    %137 = vector.broadcast %136 : f32 to vector<8x8xf32>
    %138 = arith.mulf %137, %16 : vector<8x8xf32>
    %139 = arith.addf %135, %138 : vector<8x8xf32>
    %c6_86 = arith.constant 6 : index
    %c3_87 = arith.constant 3 : index
    %140 = memref.load %arg4[%c6_86, %c3_87] : memref<8x4xf32, #tpu.memory_space<smem>>
    %141 = vector.broadcast %140 : f32 to vector<8x8xf32>
    %142 = arith.mulf %141, %20 : vector<8x8xf32>
    %143 = arith.addf %139, %142 : vector<8x8xf32>
    %c0_88 = arith.constant 0 : index
    %c6_89 = arith.constant 6 : index
    %c0_90 = arith.constant 0 : index
    %c0_91 = arith.constant 0 : index
    %144 = vector.load %arg5[%c0_88, %c6_89, %c0_90, %c0_91] : memref<1x8x8x8xf32, #tpu.memory_space<vmem>>, vector<1x1x8x8xf32>
    %145 = vector.shape_cast %144 : vector<1x1x8x8xf32> to vector<8x8xf32>
    %146 = vector.shape_cast %143 : vector<8x8xf32> to vector<1x1x8x8xf32>
    tpu.vector_store %arg5[%c0_88, %c6_89, %c0_90, %c0_91], %146 {strides = array<i32>} : memref<1x8x8x8xf32, #tpu.memory_space<vmem>>, vector<1x1x8x8xf32>,
    %c7 = arith.constant 7 : index
    %c0_92 = arith.constant 0 : index
    %147 = memref.load %arg4[%c7, %c0_92] : memref<8x4xf32, #tpu.memory_space<smem>>
    %148 = vector.broadcast %147 : f32 to vector<8x8xf32>
    %149 = arith.mulf %148, %8 : vector<8x8xf32>
    %c7_93 = arith.constant 7 : index
    %c1_94 = arith.constant 1 : index
    %150 = memref.load %arg4[%c7_93, %c1_94] : memref<8x4xf32, #tpu.memory_space<smem>>
    %151 = vector.broadcast %150 : f32 to vector<8x8xf32>
    %152 = arith.mulf %151, %12 : vector<8x8xf32>
    %153 = arith.addf %149, %152 : vector<8x8xf32>
    %c7_95 = arith.constant 7 : index
    %c2_96 = arith.constant 2 : index
    %154 = memref.load %arg4[%c7_95, %c2_96] : memref<8x4xf32, #tpu.memory_space<smem>>
    %155 = vector.broadcast %154 : f32 to vector<8x8xf32>
    %156 = arith.mulf %155, %16 : vector<8x8xf32>
    %157 = arith.addf %153, %156 : vector<8x8xf32>
    %c7_97 = arith.constant 7 : index
    %c3_98 = arith.constant 3 : index
    %158 = memref.load %arg4[%c7_97, %c3_98] : memref<8x4xf32, #tpu.memory_space<smem>>
    %159 = vector.broadcast %158 : f32 to vector<8x8xf32>
    %160 = arith.mulf %159, %20 : vector<8x8xf32>
    %161 = arith.addf %157, %160 : vector<8x8xf32>
    %c0_99 = arith.constant 0 : index
    %c7_100 = arith.constant 7 : index
    %c0_101 = arith.constant 0 : index
    %c0_102 = arith.constant 0 : index
    %162 = vector.load %arg5[%c0_99, %c7_100, %c0_101, %c0_102] : memref<1x8x8x8xf32, #tpu.memory_space<vmem>>, vector<1x1x8x8xf32>
    %163 = vector.shape_cast %162 : vector<1x1x8x8xf32> to vector<8x8xf32>
    %164 = vector.shape_cast %161 : vector<8x8xf32> to vector<1x1x8x8xf32>
    tpu.vector_store %arg5[%c0_99, %c7_100, %c0_101, %c0_102], %164 {strides = array<i32>} : memref<1x8x8x8xf32, #tpu.memory_space<vmem>>, vector<1x1x8x8xf32>,
    return
  }
  func.func @transform_0(%arg0: i32, %arg1: i32) -> (i32, i32, i32, i32) {
    %c0_i32 = arith.constant 0 : i32
    %c0_i32_0 = arith.constant 0 : i32
    %c0_i32_1 = arith.constant 0 : i32
    return %arg0, %c0_i32, %arg1, %c0_i32_0 : i32, i32, i32, i32
  }
  func.func @transform_1(%arg0: i32, %arg1: i32) -> (i32, i32) {
    %c0_i32 = arith.constant 0 : i32
    %c0_i32_0 = arith.constant 0 : i32
    %c0_i32_1 = arith.constant 0 : i32
    return %c0_i32, %c0_i32_0 : i32, i32
  }
  func.func @transform_2(%arg0: i32, %arg1: i32) -> (i32, i32) {
    %c0_i32 = arith.constant 0 : i32
    %c0_i32_0 = arith.constant 0 : i32
    %c0_i32_1 = arith.constant 0 : i32
    return %c0_i32, %c0_i32_0 : i32, i32
  }
  func.func @transform_3(%arg0: i32, %arg1: i32) -> (i32, i32, i32, i32) {
    %c0_i32 = arith.constant 0 : i32
    %c0_i32_0 = arith.constant 0 : i32
    %c0_i32_1 = arith.constant 0 : i32
    return %arg0, %c0_i32, %arg1, %c0_i32_0 : i32, i32, i32, i32
  }
}

</mosaic_0001>

<llo_original>
// kernel: tpu_custom_call.1
$region0: #{tpu_custom_call.1}
  #allocation0 [shape = 'u32[]', space=smem, size = 0x4, offset = 0x4, fixed_abs, tag = 'smem constant byte address 0x4 - core index']
  #allocation1 [shape = 'u32[144,128]{1,0:T(1,128)}', space=vmem, size = 0x12000, scoped, tag = 'internal scratch']
  %s0 = inlined_call_operand.hbm [shape: f32[2,4,8,32], index: 0, kind: input, shape index: {}]
  %s1 = inlined_call_operand.vmem [shape: f32[16,8], index: 1, kind: input, shape index: {}]
  %s2 = inlined_call_operand.vmem [shape: f32[8,4], index: 2, kind: input, shape index: {}]
  %s3 = inlined_call_operand.hbm [shape: f32[2,8,8,8], index: 3, kind: output, shape index: {}]
  %s4 = sld [smem:[#allocation0]]
  $region53: #{tpu_custom_call.1} parent=0
    _
  %s6 = ssub.s32 1, %s4
  %s7 = scalar_select 0, %s6, %s4
  $region1: #{tpu_custom_call.1} parent=0
    #allocation2 [shape = 'u8[32768]{0}', space=vmem, size = 0x8000, scoped, tag = 'input window, operand 0']
    #allocation3 [shape = 's32[2]{0}', space=sflag, size = 0x8, scoped, tag = 'scoped memory for tpu_custom_call.1']
    #allocation4 [shape = 's32[2]{0}', space=sflag, size = 0x8, scoped, tag = 'scoped memory for tpu_custom_call.1']
    #allocation5 [shape = 's32[2]{0}', space=sflag, size = 0x8, scoped, tag = 'scoped memory for tpu_custom_call.1']
    #allocation6 [shape = 'u8[4096]{0}', space=smem, size = 0x1000, scoped, tag = 'input window, operand 2, single buffered']
    #allocation7 [shape = 'u8[65536]{0}', space=vmem, size = 0x10000, scoped, tag = 'output window, operand 0']
    %8 = vsyncpa [#allocation3], 0
    %s9 = scalar_lea.sflag [#allocation3], 1
    %10 = vsyncpa %s9, 0
    %11 = vsyncpa [#allocation5], 0
    %12 = vsyncpa [#allocation4], 0
    %s13 = scalar_lea.sflag [#allocation4], 1
    %14 = vsyncpa %s13, 0
    loop: start=0, step=1, limit=4
    $region2: #{tpu_custom_call.1} parent=1 // loop_pre_header
      _
    $region3: #{tpu_custom_call.1} parent=1 // loop_header
      %s16 = sphi 0, %s20
      %p17 = scmp.ge.s32.totalorder %s16, 4
      %s23 = sphi 0, %s35
      %s24 = sphi 0, %s31
      %s25 = sphi 0, %s23
      %s26 = sphi 0, %s24
      %s27 = sphi 0, %s25
      %s28 = sphi 0, %s26
      %s40 = sphi 0, %s42
      %s43 = sphi 0, %s40
      %s44 = sphi 0, %s43
      %s60 = sphi 0, %s44
      %s64 = sphi 0, %s64
      %s66 = sphi 0, %s64
      %s67 = sphi 0, %s66
      %s81 = sphi 0, %s67
      %s85 = sphi 0, %s85
      %s87 = sphi 0, %s85
      %s88 = sphi 0, %s87
      %s102 = sphi 0, %s88
      %s110 = sphi 0, %s112
      %s113 = sphi 0, %s110
      %s114 = sphi 0, %s113
      %s130 = sphi 0, %s114
    $region4: #{tpu_custom_call.1} parent=1 // loop_header_branch
      %19 = sbr.rel (%p17) target = $region8
    $region5: #{tpu_custom_call.1} parent=1 // loop_body
      %s21 = ssub.s32 %s16, 1
      %s22 = ssub.s32 %s16, 2
      %s29 = sadd.s32 1, %s24
      %p30 = scmp.ge.s32.totalorder %s29, 1
      %s31 = scalar_select %p30, 0, %s29
      %s32 = sadd.s32 1, %s23
      %s33 = scalar_select %p30, %s32, %s23
      %p34 = scmp.ge.s32.totalorder %s33, 2
      %s35 = scalar_select %p34, 0, %s33
      %s36 = ssub.s32 %s23, %s35
      %s37 = ssub.s32 %s24, %s31
      %s38 = sor.u32 %s36, %s37
      %p39 = scmp.eq.s32.totalorder %s38, 0
      %s41 = sadd.s32 %s40, 1
      %s42 = scalar_select %p39, %s40, %s41
      %p45 = pneg %p39
      %p46 = scmp.eq.s32.totalorder %s16, 1
      %p47 = por %p45, %p46
      %p48 = scmp.ne.s32.totalorder %s40, %s43
      %p49 = scmp.eq.s32.totalorder %s16, 0
      %p50 = por %p48, %p49
      %p51 = scmp.ne.s32.totalorder %s40, %s43
      %p52 = scmp.eq.s32.totalorder %s21, 1
      %p53 = por %p51, %p52
      %p54 = scmp.ne.s32.totalorder %s43, %s44
      %p55 = scmp.eq.s32.totalorder %s21, 0
      %p56 = por %p54, %p55
      %p57 = scmp.ne.s32.totalorder %s43, %s44
      %p58 = scmp.eq.s32.totalorder %s22, 1
      %p59 = por %p57, %p58
      %p61 = scmp.ne.s32.totalorder %s44, %s60
      %p62 = scmp.eq.s32.totalorder %s22, 0
      %p63 = por %p61, %p62
      %s65 = sadd.s32 %s64, 1
      %p68 = scmp.eq.s32.totalorder %s16, 1
      %p69 = scmp.ne.s32.totalorder %s64, %s66
      %p70 = scmp.eq.s32.totalorder %s16, 0
      %p71 = por %p69, %p70
      %p72 = scmp.ne.s32.totalorder %s64, %s66
      %p73 = scmp.eq.s32.totalorder %s21, 1
      %p74 = por %p72, %p73
      %p75 = scmp.ne.s32.totalorder %s66, %s67
      %p76 = scmp.eq.s32.totalorder %s21, 0
      %p77 = por %p75, %p76
      %p78 = scmp.ne.s32.totalorder %s66, %s67
      %p79 = scmp.eq.s32.totalorder %s22, 1
      %p80 = por %p78, %p79
      %p82 = scmp.ne.s32.totalorder %s67, %s81
      %p83 = scmp.eq.s32.totalorder %s22, 0
      %p84 = por %p82, %p83
      %s86 = sadd.s32 %s85, 1
      %p89 = scmp.eq.s32.totalorder %s16, 1
      %p90 = scmp.ne.s32.totalorder %s85, %s87
      %p91 = scmp.eq.s32.totalorder %s16, 0
      %p92 = por %p90, %p91
      %p93 = scmp.ne.s32.totalorder %s85, %s87
      %p94 = scmp.eq.s32.totalorder %s21, 1
      %p95 = por %p93, %p94
      %p96 = scmp.ne.s32.totalorder %s87, %s88
      %p97 = scmp.eq.s32.totalorder %s21, 0
      %p98 = por %p96, %p97
      %p99 = scmp.ne.s32.totalorder %s87, %s88
      %p100 = scmp.eq.s32.totalorder %s22, 1
      %p101 = por %p99, %p100
      %p103 = scmp.ne.s32.totalorder %s88, %s102
      %p104 = scmp.eq.s32.totalorder %s22, 0
      %p105 = por %p103, %p104
      %s106 = ssub.s32 %s23, %s35
      %s107 = ssub.s32 %s24, %s31
      %s108 = sor.u32 %s106, %s107
      %p109 = scmp.eq.s32.totalorder %s108, 0
      %s111 = sadd.s32 %s110, 1
      %s112 = scalar_select %p109, %s110, %s111
      %p115 = pneg %p109
      %p116 = scmp.eq.s32.totalorder %s16, 1
      %p117 = por %p115, %p116
      %p118 = scmp.ne.s32.totalorder %s110, %s113
      %p119 = scmp.eq.s32.totalorder %s16, 0
      %p120 = por %p118, %p119
      %p121 = scmp.ne.s32.totalorder %s110, %s113
      %p122 = scmp.eq.s32.totalorder %s21, 1
      %p123 = por %p121, %p122
      %p124 = scmp.ne.s32.totalorder %s113, %s114
      %p125 = scmp.eq.s32.totalorder %s21, 0
      %p126 = por %p124, %p125
      %p127 = scmp.ne.s32.totalorder %s113, %s114
      %p128 = scmp.eq.s32.totalorder %s22, 1
      %p129 = por %p127, %p128
      %p131 = scmp.ne.s32.totalorder %s114, %s130
      %p132 = scmp.eq.s32.totalorder %s22, 0
      %p133 = por %p131, %p132
      %p134 = scmp.le.s32.totalorder 1, %s16
      %p135 = scmp.lt.s32.totalorder %s16, 3
      %p136 = pnand %p134, %p135
      %p137 = pneg %p136
      // Predicated region
      $region9: #{tpu_custom_call.1} parent=5 // pred_check
        _
      $region10: #{tpu_custom_call.1} parent=5 // pred_check_branch
        %139 = sbr.rel (%p136) target = $region12
      $region11: #{tpu_custom_call.1} parent=5 // pred_region
        %s140 = ssub.s32 %s16, 1
        // Predicated region
        $region13: #{tpu_custom_call.1} parent=11 // pred_check
          %p141 = pneg %p77
        $region14: #{tpu_custom_call.1} parent=11 // pred_check_branch
          %143 = sbr.rel (%p141) target = $region16
        $region15: #{tpu_custom_call.1} parent=11 // pred_region
          _
        $region16: #{tpu_custom_call.1} parent=11 // pred_fallthru
          _
        // Predicated region
        $region17: #{tpu_custom_call.1} parent=11 // pred_check
          %p144 = pneg %p98
        $region18: #{tpu_custom_call.1} parent=11 // pred_check_branch
          %146 = sbr.rel (%p144) target = $region20
        $region19: #{tpu_custom_call.1} parent=11 // pred_region
          %s148 = ssub.s32 128, 128
          %149 = vsyncadd [#allocation5], %s148
          %s151 = sshll.u32 %s2, 4
          %s152 = int_to_ptr.vmem [resolvable:$true] %s151
          %154 = dma.vmem_to_smem %s152, 128, [#allocation6], [#allocation5]
        $region20: #{tpu_custom_call.1} parent=11 // pred_fallthru
          _
      $region12: #{tpu_custom_call.1} parent=5 // pred_fallthru
        _
      %p155 = scmp.lt.s32.totalorder %s16, 2
      // Predicated region
      $region21: #{tpu_custom_call.1} parent=5 // pred_check
        %p156 = pneg %p155
      $region22: #{tpu_custom_call.1} parent=5 // pred_check_branch
        %158 = sbr.rel (%p156) target = $region24
      $region23: #{tpu_custom_call.1} parent=5 // pred_region
        // Predicated region
        $region25: #{tpu_custom_call.1} parent=23 // pred_check
          %p159 = pneg %p50
        $region26: #{tpu_custom_call.1} parent=23 // pred_check_branch
          %161 = sbr.rel (%p159) target = $region28
        $region27: #{tpu_custom_call.1} parent=23 // pred_region
          %s162 = sand.u32 %s40, 1
          %s163 = scalar_lea.sflag [#allocation3], %s162
          %s164 = sand.u32 %s40, 1
          %s165 = smul.addr %s164, 32
          %s166 = scalar_lea.vmem [#allocation2], %s165
          %s168 = ssub.s32 512, 512
          %169 = vsyncadd %s163, %s168
          %s170 = smul.addr %s23, 4
          %s171 = sadd.s32 %s24, %s170
          %s172 = smul.addr %s171, 128
          %s173 = scalar_lea.hbm %s0, %s172
          %s174 = sshll.u32 %s166, 4
          %s175 = int_to_ptr.vmem [resolvable:$true] %s174
          %180 = dma.hbm_to_vmem [thread:$0]  %s173, 512, %s175, %s163, 128, 128, 8
        $region28: #{tpu_custom_call.1} parent=23 // pred_fallthru
          _
      $region24: #{tpu_custom_call.1} parent=5 // pred_fallthru
        _
      %p181 = scmp.le.s32.totalorder 1, %s16
      %p182 = scmp.lt.s32.totalorder %s16, 3
      %p183 = pnand %p181, %p182
      %p184 = pneg %p183
      // Predicated region
      $region29: #{tpu_custom_call.1} parent=5 // pred_check
        _
      $region30: #{tpu_custom_call.1} parent=5 // pred_check_branch
        %186 = sbr.rel (%p183) target = $region32
      $region31: #{tpu_custom_call.1} parent=5 // pred_region
        %s187 = ssub.s32 %s16, 1
        %s188 = sand.u32 %s43, 1
        %s189 = scalar_lea.sflag [#allocation3], %s188
        %s190 = sand.u32 %s43, 1
        %s191 = smul.addr %s190, 32
        %s192 = scalar_lea.vmem [#allocation2], %s191
        // Predicated region
        $region33: #{tpu_custom_call.1} parent=31 // pred_check
          %p193 = pneg %p56
        $region34: #{tpu_custom_call.1} parent=31 // pred_check_branch
          %195 = sbr.rel (%p193) target = $region36
        $region35: #{tpu_custom_call.1} parent=31 // pred_region
          %196 = dma.done %s189, 512
        $region36: #{tpu_custom_call.1} parent=31 // pred_fallthru
          _
        // Predicated region
        $region37: #{tpu_custom_call.1} parent=31 // pred_check
          %p197 = pneg %p98
        $region38: #{tpu_custom_call.1} parent=31 // pred_check_branch
          %199 = sbr.rel (%p197) target = $region40
        $region39: #{tpu_custom_call.1} parent=31 // pred_region
          %200 = dma.done [#allocation5], 128
        $region40: #{tpu_custom_call.1} parent=31 // pred_fallthru
          _
        %201 = sfence
        %s202 = sand.u32 %s43, 1
        %s203 = scalar_lea.sflag [#allocation3], %s202
        %s204 = sand.u32 %s43, 1
        %s205 = smul.addr %s204, 32
        %s206 = scalar_lea.vmem [#allocation2], %s205
        %p207 = pneg %p56
        %p208 = pneg %p53
        %p209 = pneg %p77
        %p210 = pneg %p74
        %p211 = pneg %p98
        %p212 = pneg %p95
        %p213 = pneg %p126
        %p214 = pneg %p123
        %s215 = sand.u32 %s113, 1
        %s216 = scalar_lea.sflag [#allocation4], %s215
        %s217 = sand.u32 %s113, 1
        %s218 = smul.addr %s217, 64
        %s219 = scalar_lea.vmem [#allocation7], %s218
        %v220 = vld [vmem:[%s192] sm:$0xff]
        %v221 = vld [vmem:[%s192 + $0x8] sm:$0xff]
        %v222 = vld [vmem:[%s192 + $0x10] sm:$0xff]
        %v223 = vld [vmem:[%s192 + $0x18] sm:$0xff]
        %228 = vrot.lane.b32.xlu0 %v220, 112
        %v229 = vpop.permute.xlu0 %228
        %230 = vrot.lane.b32.xlu0 %v221, 112
        %v231 = vpop.permute.xlu0 %230
        %232 = vrot.lane.b32.xlu0 %v222, 112
        %v233 = vpop.permute.xlu0 %232
        %234 = vrot.lane.b32.xlu0 %v223, 112
        %v235 = vpop.permute.xlu0 %234
        %v240 = vadd.f32 %v220, %v229
        %v241 = vadd.f32 %v221, %v231
        %v242 = vadd.f32 %v222, %v233
        %v243 = vadd.f32 %v223, %v235
        %v244 = vld [vmem:[%s1] sm:$0xff]
        %v245 = vld [vmem:[%s1 + $0x8] sm:$0xff]
        %vm246 = vcmask 130048
        %v248 = vsel %vm246, %v240, 0
        %250 = vmatprep.subr.mxu0 0.0
        %251 = vmatpush1.msra.mxu0 0.0
        %252 = vmatprep.subr.mxu0 0.0
        %253 = vmatpush1.msra.mxu0 0.0
        %254 = vmatprep.subr.mxu0 0.0
        %255 = vmatpush1.msra.mxu0 0.0
        %256 = vmatprep.subr.mxu0 0.0
        %257 = vmatpush1.msra.mxu0 0.0
        %258 = vmatprep.subr.mxu0 0.0
        %259 = vmatpush1.msra.mxu0 0.0
        %260 = vmatprep.subr.mxu0 0.0
        %261 = vmatpush1.msra.mxu0 0.0
        %262 = vmatprep.subr.mxu0 0.0
        %263 = vmatpush1.msra.mxu0 0.0
        %264 = vmatprep.subr.mxu0 0.0
        %265 = vmatpush1.msra.mxu0 0.0
        %266 = vmatprep.subr.mxu0 0.0
        %267 = vmatpush1.msra.mxu0 0.0
        %268 = vmatprep.subr.mxu0 0.0
        %269 = vmatpush1.msra.mxu0 0.0
        %270 = vmatprep.subr.mxu0 0.0
        %271 = vmatpush1.msra.mxu0 0.0
        %272 = vmatprep.subr.mxu0 0.0
        %273 = vmatpush1.msra.mxu0 0.0
        %274 = vmatprep.subr.mxu0 0.0
        %275 = vmatpush1.msra.mxu0 0.0
        %276 = vmatprep.subr.mxu0 0.0
        %277 = vmatpush1.msra.mxu0 0.0
        %278 = vmatprep.subr.mxu0 0.0
        %279 = vmatpush1.msra.mxu0 %v245
        %280 = vmatprep.subr.mxu0 0.0
        %281 = vmatpush1.msra.mxu0 %v244
        %282 = vmatprep.subr.mxu0 0.0
        %283 = vmatpush2.msra.mxu0 0.0
        %284 = vmatprep.subr.mxu0 0.0
        %285 = vmatpush2.msra.mxu0 0.0
        %286 = vmatprep.subr.mxu0 0.0
        %287 = vmatpush2.msra.mxu0 0.0
        %288 = vmatprep.subr.mxu0 0.0
        %289 = vmatpush2.msra.mxu0 0.0
        %290 = vmatprep.subr.mxu0 0.0
        %291 = vmatpush2.msra.mxu0 0.0
        %292 = vmatprep.subr.mxu0 0.0
        %293 = vmatpush2.msra.mxu0 0.0
        %294 = vmatprep.subr.mxu0 0.0
        %295 = vmatpush2.msra.mxu0 0.0
        %296 = vmatprep.subr.mxu0 0.0
        %297 = vmatpush2.msra.mxu0 0.0
        %298 = vmatprep.subr.mxu0 0.0
        %299 = vmatpush2.msra.mxu0 0.0
        %300 = vmatprep.subr.mxu0 0.0
        %301 = vmatpush2.msra.mxu0 0.0
        %302 = vmatprep.subr.mxu0 0.0
        %303 = vmatpush2.msra.mxu0 0.0
        %304 = vmatprep.subr.mxu0 0.0
        %305 = vmatpush2.msra.mxu0 0.0
        %306 = vmatprep.subr.mxu0 0.0
        %307 = vmatpush2.msra.mxu0 0.0
        %308 = vmatprep.subr.mxu0 0.0
        %309 = vmatpush2.msra.mxu0 0.0
        %310 = vmatprep.subr.mxu0 0.0
        %311 = vmatpush2.msra.mxu0 0.0
        %312 = vmatprep.subr.mxu0 0.0
        %313 = vmatpush2.msra.mxu0 0.0
        %314 = vmatprep.mubr.f32.mxu0 0.0
        %315 = vmatmul.mubr.f32.gmra.mxu0 %v248
        %v316 = vpop.f32.mrf.mxu0
        %v317 = vadd.f32 0.0, %v316
        %v318 = vpop.f32.mrf.mxu0
        %319 = vdwg.mxu0
        %v321 = vsel %vm246, %v241, 0
        %323 = vmatprep.subr.mxu0 0.0
        %324 = vmatpush1.msra.mxu0 0.0
        %325 = vmatprep.subr.mxu0 0.0
        %326 = vmatpush1.msra.mxu0 0.0
        %327 = vmatprep.subr.mxu0 0.0
        %328 = vmatpush1.msra.mxu0 0.0
        %329 = vmatprep.subr.mxu0 0.0
        %330 = vmatpush1.msra.mxu0 0.0
        %331 = vmatprep.subr.mxu0 0.0
        %332 = vmatpush1.msra.mxu0 0.0
        %333 = vmatprep.subr.mxu0 0.0
        %334 = vmatpush1.msra.mxu0 0.0
        %335 = vmatprep.subr.mxu0 0.0
        %336 = vmatpush1.msra.mxu0 0.0
        %337 = vmatprep.subr.mxu0 0.0
        %338 = vmatpush1.msra.mxu0 0.0
        %339 = vmatprep.subr.mxu0 0.0
        %340 = vmatpush1.msra.mxu0 0.0
        %341 = vmatprep.subr.mxu0 0.0
        %342 = vmatpush1.msra.mxu0 0.0
        %343 = vmatprep.subr.mxu0 0.0
        %344 = vmatpush1.msra.mxu0 0.0
        %345 = vmatprep.subr.mxu0 0.0
        %346 = vmatpush1.msra.mxu0 0.0
        %347 = vmatprep.subr.mxu0 0.0
        %348 = vmatpush1.msra.mxu0 0.0
        %349 = vmatprep.subr.mxu0 0.0
        %350 = vmatpush1.msra.mxu0 0.0
        %351 = vmatprep.subr.mxu0 0.0
        %352 = vmatpush1.msra.mxu0 %v245
        %353 = vmatprep.subr.mxu0 0.0
        %354 = vmatpush1.msra.mxu0 %v244
        %355 = vmatprep.subr.mxu0 0.0
        %356 = vmatpush2.msra.mxu0 0.0
        %357 = vmatprep.subr.mxu0 0.0
        %358 = vmatpush2.msra.mxu0 0.0
        %359 = vmatprep.subr.mxu0 0.0
        %360 = vmatpush2.msra.mxu0 0.0
        %361 = vmatprep.subr.mxu0 0.0
        %362 = vmatpush2.msra.mxu0 0.0
        %363 = vmatprep.subr.mxu0 0.0
        %364 = vmatpush2.msra.mxu0 0.0
        %365 = vmatprep.subr.mxu0 0.0
        %366 = vmatpush2.msra.mxu0 0.0
        %367 = vmatprep.subr.mxu0 0.0
        %368 = vmatpush2.msra.mxu0 0.0
        %369 = vmatprep.subr.mxu0 0.0
        %370 = vmatpush2.msra.mxu0 0.0
        %371 = vmatprep.subr.mxu0 0.0
        %372 = vmatpush2.msra.mxu0 0.0
        %373 = vmatprep.subr.mxu0 0.0
        %374 = vmatpush2.msra.mxu0 0.0
        %375 = vmatprep.subr.mxu0 0.0
        %376 = vmatpush2.msra.mxu0 0.0
        %377 = vmatprep.subr.mxu0 0.0
        %378 = vmatpush2.msra.mxu0 0.0
        %379 = vmatprep.subr.mxu0 0.0
        %380 = vmatpush2.msra.mxu0 0.0
        %381 = vmatprep.subr.mxu0 0.0
        %382 = vmatpush2.msra.mxu0 0.0
        %383 = vmatprep.subr.mxu0 0.0
        %384 = vmatpush2.msra.mxu0 0.0
        %385 = vmatprep.subr.mxu0 0.0
        %386 = vmatpush2.msra.mxu0 0.0
        %387 = vmatprep.mubr.f32.mxu0 0.0
        %388 = vmatmul.mubr.f32.gmra.mxu0 %v321
        %v389 = vpop.f32.mrf.mxu0
        %v390 = vadd.f32 0.0, %v389
        %v391 = vpop.f32.mrf.mxu0
        %392 = vdwg.mxu0
        %v394 = vsel %vm246, %v242, 0
        %396 = vmatprep.subr.mxu0 0.0
        %397 = vmatpush1.msra.mxu0 0.0
        %398 = vmatprep.subr.mxu0 0.0
        %399 = vmatpush1.msra.mxu0 0.0
        %400 = vmatprep.subr.mxu0 0.0
        %401 = vmatpush1.msra.mxu0 0.0
        %402 = vmatprep.subr.mxu0 0.0
        %403 = vmatpush1.msra.mxu0 0.0
        %404 = vmatprep.subr.mxu0 0.0
        %405 = vmatpush1.msra.mxu0 0.0
        %406 = vmatprep.subr.mxu0 0.0
        %407 = vmatpush1.msra.mxu0 0.0
        %408 = vmatprep.subr.mxu0 0.0
        %409 = vmatpush1.msra.mxu0 0.0
        %410 = vmatprep.subr.mxu0 0.0
        %411 = vmatpush1.msra.mxu0 0.0
        %412 = vmatprep.subr.mxu0 0.0
        %413 = vmatpush1.msra.mxu0 0.0
        %414 = vmatprep.subr.mxu0 0.0
        %415 = vmatpush1.msra.mxu0 0.0
        %416 = vmatprep.subr.mxu0 0.0
        %417 = vmatpush1.msra.mxu0 0.0
        %418 = vmatprep.subr.mxu0 0.0
        %419 = vmatpush1.msra.mxu0 0.0
        %420 = vmatprep.subr.mxu0 0.0
        %421 = vmatpush1.msra.mxu0 0.0
        %422 = vmatprep.subr.mxu0 0.0
        %423 = vmatpush1.msra.mxu0 0.0
        %424 = vmatprep.subr.mxu0 0.0
        %425 = vmatpush1.msra.mxu0 %v245
        %426 = vmatprep.subr.mxu0 0.0
        %427 = vmatpush1.msra.mxu0 %v244
        %428 = vmatprep.subr.mxu0 0.0
        %429 = vmatpush2.msra.mxu0 0.0
        %430 = vmatprep.subr.mxu0 0.0
        %431 = vmatpush2.msra.mxu0 0.0
        %432 = vmatprep.subr.mxu0 0.0
        %433 = vmatpush2.msra.mxu0 0.0
        %434 = vmatprep.subr.mxu0 0.0
        %435 = vmatpush2.msra.mxu0 0.0
        %436 = vmatprep.subr.mxu0 0.0
        %437 = vmatpush2.msra.mxu0 0.0
        %438 = vmatprep.subr.mxu0 0.0
        %439 = vmatpush2.msra.mxu0 0.0
        %440 = vmatprep.subr.mxu0 0.0
        %441 = vmatpush2.msra.mxu0 0.0
        %442 = vmatprep.subr.mxu0 0.0
        %443 = vmatpush2.msra.mxu0 0.0
        %444 = vmatprep.subr.mxu0 0.0
        %445 = vmatpush2.msra.mxu0 0.0
        %446 = vmatprep.subr.mxu0 0.0
        %447 = vmatpush2.msra.mxu0 0.0
        %448 = vmatprep.subr.mxu0 0.0
        %449 = vmatpush2.msra.mxu0 0.0
        %450 = vmatprep.subr.mxu0 0.0
        %451 = vmatpush2.msra.mxu0 0.0
        %452 = vmatprep.subr.mxu0 0.0
        %453 = vmatpush2.msra.mxu0 0.0
        %454 = vmatprep.subr.mxu0 0.0
        %455 = vmatpush2.msra.mxu0 0.0
        %456 = vmatprep.subr.mxu0 0.0
        %457 = vmatpush2.msra.mxu0 0.0
        %458 = vmatprep.subr.mxu0 0.0
        %459 = vmatpush2.msra.mxu0 0.0
        %460 = vmatprep.mubr.f32.mxu0 0.0
        %461 = vmatmul.mubr.f32.gmra.mxu0 %v394
        %v462 = vpop.f32.mrf.mxu0
        %v463 = vadd.f32 0.0, %v462
        %v464 = vpop.f32.mrf.mxu0
        %465 = vdwg.mxu0
        %v467 = vsel %vm246, %v243, 0
        %469 = vmatprep.subr.mxu0 0.0
        %470 = vmatpush1.msra.mxu0 0.0
        %471 = vmatprep.subr.mxu0 0.0
        %472 = vmatpush1.msra.mxu0 0.0
        %473 = vmatprep.subr.mxu0 0.0
        %474 = vmatpush1.msra.mxu0 0.0
        %475 = vmatprep.subr.mxu0 0.0
        %476 = vmatpush1.msra.mxu0 0.0
        %477 = vmatprep.subr.mxu0 0.0
        %478 = vmatpush1.msra.mxu0 0.0
        %479 = vmatprep.subr.mxu0 0.0
        %480 = vmatpush1.msra.mxu0 0.0
        %481 = vmatprep.subr.mxu0 0.0
        %482 = vmatpush1.msra.mxu0 0.0
        %483 = vmatprep.subr.mxu0 0.0
        %484 = vmatpush1.msra.mxu0 0.0
        %485 = vmatprep.subr.mxu0 0.0
        %486 = vmatpush1.msra.mxu0 0.0
        %487 = vmatprep.subr.mxu0 0.0
        %488 = vmatpush1.msra.mxu0 0.0
        %489 = vmatprep.subr.mxu0 0.0
        %490 = vmatpush1.msra.mxu0 0.0
        %491 = vmatprep.subr.mxu0 0.0
        %492 = vmatpush1.msra.mxu0 0.0
        %493 = vmatprep.subr.mxu0 0.0
        %494 = vmatpush1.msra.mxu0 0.0
        %495 = vmatprep.subr.mxu0 0.0
        %496 = vmatpush1.msra.mxu0 0.0
        %497 = vmatprep.subr.mxu0 0.0
        %498 = vmatpush1.msra.mxu0 %v245
        %499 = vmatprep.subr.mxu0 0.0
        %500 = vmatpush1.msra.mxu0 %v244
        %501 = vmatprep.subr.mxu0 0.0
        %502 = vmatpush2.msra.mxu0 0.0
        %503 = vmatprep.subr.mxu0 0.0
        %504 = vmatpush2.msra.mxu0 0.0
        %505 = vmatprep.subr.mxu0 0.0
        %506 = vmatpush2.msra.mxu0 0.0
        %507 = vmatprep.subr.mxu0 0.0
        %508 = vmatpush2.msra.mxu0 0.0
        %509 = vmatprep.subr.mxu0 0.0
        %510 = vmatpush2.msra.mxu0 0.0
        %511 = vmatprep.subr.mxu0 0.0
        %512 = vmatpush2.msra.mxu0 0.0
        %513 = vmatprep.subr.mxu0 0.0
        %514 = vmatpush2.msra.mxu0 0.0
        %515 = vmatprep.subr.mxu0 0.0
        %516 = vmatpush2.msra.mxu0 0.0
        %517 = vmatprep.subr.mxu0 0.0
        %518 = vmatpush2.msra.mxu0 0.0
        %519 = vmatprep.subr.mxu0 0.0
        %520 = vmatpush2.msra.mxu0 0.0
        %521 = vmatprep.subr.mxu0 0.0
        %522 = vmatpush2.msra.mxu0 0.0
        %523 = vmatprep.subr.mxu0 0.0
        %524 = vmatpush2.msra.mxu0 0.0
        %525 = vmatprep.subr.mxu0 0.0
        %526 = vmatpush2.msra.mxu0 0.0
        %527 = vmatprep.subr.mxu0 0.0
        %528 = vmatpush2.msra.mxu0 0.0
        %529 = vmatprep.subr.mxu0 0.0
        %530 = vmatpush2.msra.mxu0 0.0
        %531 = vmatprep.subr.mxu0 0.0
        %532 = vmatpush2.msra.mxu0 0.0
        %533 = vmatprep.mubr.f32.mxu0 0.0
        %534 = vmatmul.mubr.f32.gmra.mxu0 %v467
        %v535 = vpop.f32.mrf.mxu0
        %v536 = vadd.f32 0.0, %v535
        %v537 = vpop.f32.mrf.mxu0
        %538 = vdwg.mxu0
        %s539 = sld [smem:[#allocation6]]
        %v540 = vstv %s539
        %v541 = vmul.f32 %v540, %v317
        %s542 = sld [smem:[#allocation6 + $0x1]]
        %v543 = vstv %s542
        %v544 = vmul.f32 %v543, %v390
        %v545 = vadd.f32 %v541, %v544
        %s546 = sld [smem:[#allocation6 + $0x2]]
        %v547 = vstv %s546
        %v548 = vmul.f32 %v547, %v463
        %v549 = vadd.f32 %v545, %v548
        %s550 = sld [smem:[#allocation6 + $0x3]]
        %v551 = vstv %s550
        %v552 = vmul.f32 %v551, %v536
        %v553 = vadd.f32 %v549, %v552
        %vm554 = vcmask 64512
        %555 = vst.msk [vmem:[%s219] sm:$0xff] %vm554, %v553
        %s556 = sld [smem:[#allocation6 + $0x80]]
        %v557 = vstv %s556
        %v558 = vmul.f32 %v557, %v317
        %s559 = sld [smem:[#allocation6 + $0x81]]
        %v560 = vstv %s559
        %v561 = vmul.f32 %v560, %v390
        %v562 = vadd.f32 %v558, %v561
        %s563 = sld [smem:[#allocation6 + $0x82]]
        %v564 = vstv %s563
        %v565 = vmul.f32 %v564, %v463
        %v566 = vadd.f32 %v562, %v565
        %s567 = sld [smem:[#allocation6 + $0x83]]
        %v568 = vstv %s567
        %v569 = vmul.f32 %v568, %v536
        %v570 = vadd.f32 %v566, %v569
        %s571 = scalar_lea.vmem %s219, 8 [#allocation7]
        %572 = vst.msk [vmem:[%s571] sm:$0xff] %vm554, %v570
        %s573 = sld [smem:[#allocation6 + $0x100]]
        %v574 = vstv %s573
        %v575 = vmul.f32 %v574, %v317
        %s576 = sld [smem:[#allocation6 + $0x101]]
        %v577 = vstv %s576
        %v578 = vmul.f32 %v577, %v390
        %v579 = vadd.f32 %v575, %v578
        %s580 = sld [smem:[#allocation6 + $0x102]]
        %v581 = vstv %s580
        %v582 = vmul.f32 %v581, %v463
        %v583 = vadd.f32 %v579, %v582
        %s584 = sld [smem:[#allocation6 + $0x103]]
        %v585 = vstv %s584
        %v586 = vmul.f32 %v585, %v536
        %v587 = vadd.f32 %v583, %v586
        %s588 = scalar_lea.vmem %s219, 16 [#allocation7]
        %589 = vst.msk [vmem:[%s588] sm:$0xff] %vm554, %v587
        %s590 = sld [smem:[#allocation6 + $0x180]]
        %v591 = vstv %s590
        %v592 = vmul.f32 %v591, %v317
        %s593 = sld [smem:[#allocation6 + $0x181]]
        %v594 = vstv %s593
        %v595 = vmul.f32 %v594, %v390
        %v596 = vadd.f32 %v592, %v595
        %s597 = sld [smem:[#allocation6 + $0x182]]
        %v598 = vstv %s597
        %v599 = vmul.f32 %v598, %v463
        %v600 = vadd.f32 %v596, %v599
        %s601 = sld [smem:[#allocation6 + $0x183]]
        %v602 = vstv %s601
        %v603 = vmul.f32 %v602, %v536
        %v604 = vadd.f32 %v600, %v603
        %s605 = scalar_lea.vmem %s219, 24 [#allocation7]
        %606 = vst.msk [vmem:[%s605] sm:$0xff] %vm554, %v604
        %s607 = sld [smem:[#allocation6 + $0x200]]
        %v608 = vstv %s607
        %v609 = vmul.f32 %v608, %v317
        %s610 = sld [smem:[#allocation6 + $0x201]]
        %v611 = vstv %s610
        %v612 = vmul.f32 %v611, %v390
        %v613 = vadd.f32 %v609, %v612
        %s614 = sld [smem:[#allocation6 + $0x202]]
        %v615 = vstv %s614
        %v616 = vmul.f32 %v615, %v463
        %v617 = vadd.f32 %v613, %v616
        %s618 = sld [smem:[#allocation6 + $0x203]]
        %v619 = vstv %s618
        %v620 = vmul.f32 %v619, %v536
        %v621 = vadd.f32 %v617, %v620
        %s622 = scalar_lea.vmem %s219, 32 [#allocation7]
        %623 = vst.msk [vmem:[%s622] sm:$0xff] %vm554, %v621
        %s624 = sld [smem:[#allocation6 + $0x280]]
        %v625 = vstv %s624
        %v626 = vmul.f32 %v625, %v317
        %s627 = sld [smem:[#allocation6 + $0x281]]
        %v628 = vstv %s627
        %v629 = vmul.f32 %v628, %v390
        %v630 = vadd.f32 %v626, %v629
        %s631 = sld [smem:[#allocation6 + $0x282]]
        %v632 = vstv %s631
        %v633 = vmul.f32 %v632, %v463
        %v634 = vadd.f32 %v630, %v633
        %s635 = sld [smem:[#allocation6 + $0x283]]
        %v636 = vstv %s635
        %v637 = vmul.f32 %v636, %v536
        %v638 = vadd.f32 %v634, %v637
        %s639 = scalar_lea.vmem %s219, 40 [#allocation7]
        %640 = vst.msk [vmem:[%s639] sm:$0xff] %vm554, %v638
        %s641 = sld [smem:[#allocation6 + $0x300]]
        %v642 = vstv %s641
        %v643 = vmul.f32 %v642, %v317
        %s644 = sld [smem:[#allocation6 + $0x301]]
        %v645 = vstv %s644
        %v646 = vmul.f32 %v645, %v390
        %v647 = vadd.f32 %v643, %v646
        %s648 = sld [smem:[#allocation6 + $0x302]]
        %v649 = vstv %s648
        %v650 = vmul.f32 %v649, %v463
        %v651 = vadd.f32 %v647, %v650
        %s652 = sld [smem:[#allocation6 + $0x303]]
        %v653 = vstv %s652
        %v654 = vmul.f32 %v653, %v536
        %v655 = vadd.f32 %v651, %v654
        %s656 = scalar_lea.vmem %s219, 48 [#allocation7]
        %657 = vst.msk [vmem:[%s656] sm:$0xff] %vm554, %v655
        %s658 = sld [smem:[#allocation6 + $0x380]]
        %v659 = vstv %s658
        %v660 = vmul.f32 %v659, %v317
        %s661 = sld [smem:[#allocation6 + $0x381]]
        %v662 = vstv %s661
        %v663 = vmul.f32 %v662, %v390
        %v664 = vadd.f32 %v660, %v663
        %s665 = sld [smem:[#allocation6 + $0x382]]
        %v666 = vstv %s665
        %v667 = vmul.f32 %v666, %v463
        %v668 = vadd.f32 %v664, %v667
        %s669 = sld [smem:[#allocation6 + $0x383]]
        %v670 = vstv %s669
        %v671 = vmul.f32 %v670, %v536
        %v672 = vadd.f32 %v668, %v671
        %s673 = scalar_lea.vmem %s219, 56 [#allocation7]
        %674 = vst.msk [vmem:[%s673] sm:$0xff] %vm554, %v672
        %s675 = sand.u32 %s113, 1
        %s676 = scalar_lea.sflag [#allocation4], %s675
        %s677 = sand.u32 %s113, 1
        %s678 = smul.addr %s677, 64
        %s679 = scalar_lea.vmem [#allocation7], %s678
        // Predicated region
        $region41: #{tpu_custom_call.1} parent=31 // pred_check
          %p680 = pneg %p123
        $region42: #{tpu_custom_call.1} parent=31 // pred_check_branch
          %682 = sbr.rel (%p680) target = $region44
        $region43: #{tpu_custom_call.1} parent=31 // pred_region
          %s684 = ssub.s32 1024, 1024
          %685 = vsyncadd %s676, %s684
          %s686 = smul.addr %s25, 8
          %s687 = sadd.s32 %s26, %s686
          %s688 = smul.addr %s687, 128
          %s689 = scalar_lea.hbm %s3, %s688
          %s690 = sshll.u32 %s679, 4
          %s691 = int_to_ptr.vmem [resolvable:$true] %s690
          %696 = dma.vmem_to_hbm [thread:$0]  %s691, 1024, %s689, %s676, 128, 128, 8
        $region44: #{tpu_custom_call.1} parent=31 // pred_fallthru
          _
      $region32: #{tpu_custom_call.1} parent=5 // pred_fallthru
        _
      %p697 = scmp.le.s32.totalorder 2, %s16
      // Predicated region
      $region45: #{tpu_custom_call.1} parent=5 // pred_check
        %p698 = pneg %p697
      $region46: #{tpu_custom_call.1} parent=5 // pred_check_branch
        %700 = sbr.rel (%p698) target = $region48
      $region47: #{tpu_custom_call.1} parent=5 // pred_region
        %s701 = ssub.s32 %s16, 2
        // Predicated region
        $region49: #{tpu_custom_call.1} parent=47 // pred_check
          %p702 = pneg %p129
        $region50: #{tpu_custom_call.1} parent=47 // pred_check_branch
          %704 = sbr.rel (%p702) target = $region52
        $region51: #{tpu_custom_call.1} parent=47 // pred_region
          %s705 = sand.u32 %s114, 1
          %s706 = scalar_lea.sflag [#allocation4], %s705
          %s707 = sand.u32 %s114, 1
          %s708 = smul.addr %s707, 64
          %s709 = scalar_lea.vmem [#allocation7], %s708
          %710 = dma.done %s706, 1024
        $region52: #{tpu_custom_call.1} parent=47 // pred_fallthru
          _
      $region48: #{tpu_custom_call.1} parent=5 // pred_fallthru
        _
    $region6: #{tpu_custom_call.1} parent=1 // loop_footer
      %s20 = sadd.s32 1, %s16
    $region7: #{tpu_custom_call.1} parent=1 // loop_footer_branch
      %15 = sbr.rel target = $region3
    $region8: #{tpu_custom_call.1} parent=1 // loop_exit
      _
    %711 = vsyncpa [#allocation3], 1
    %s712 = scalar_lea.sflag [#allocation3], 1
    %713 = vsyncpa %s712, 1
    %714 = vsyncpa [#allocation4], 1
    %s715 = scalar_lea.sflag [#allocation4], 1
    %716 = vsyncpa %s715, 1
    %717 = vsyncpa [#allocation5], 1
    %s718 = scalar_lea.sflag [#allocation5], 1
    %719 = vsyncpa %s718, 1

</llo_original>
